<compile_context>
chip_gen: v6e
topology: v6e:2x2x1
jax: 0.10.0
libtpu: 0.0.40
codegen_flags: <defaults>
</compile_context>

<pallas_src>
import functools

import jax
import jax.numpy as jnp
from jax import lax
from jax.experimental import pallas as pl
from jax.experimental.pallas import tpu as pltpu


# ----------------------------------------------------------------------------
# Tile / grouping helpers
# ----------------------------------------------------------------------------
def _pick_tile(dim, target, granule):
    """Largest multiple of `granule` <= target that divides `dim`; else full dim."""
    if dim <= target:
        return dim
    t = (min(target, dim) // granule) * granule
    while t >= granule:
        if dim % t == 0:
            return t
        t -= granule
    return dim


def _pick_seq_tile(dim, target):
    """Sequence (sublane) tile: prefer multiples of 128, then multiples of 8."""
    t = _pick_tile(dim, target, 128)
    if t == dim and dim > target:
        t = _pick_tile(dim, target, 8)
    return t


def _heads_per_group(heads, d_k):
    """Smallest head group whose column width is a multiple of 128 lanes.

    One head per group when d_k is already a 128-multiple (production case);
    all heads in one group (width == d_model, always a legal block) when
    d_model itself is below 128 lanes.
    """
    for g in range(1, heads):
        if heads % g == 0 and (g * d_k) % 128 == 0:
            return g
    return heads


def _vmem_limit_bytes(block_bytes, scratch_bytes):
    """Scoped-VMEM request sized from actual block bytes (double-buffered, x2
    margin), floored at the 32 MiB default, capped at 64 MiB (valid on v7x)."""
    need = 2 * (2 * block_bytes + scratch_bytes) + (2 << 20)
    return int(min(64 << 20, max(32 << 20, need)))


# ----------------------------------------------------------------------------
# Linear projection kernel: y = x @ W^T + b  (PyTorch Linear layout)
# ----------------------------------------------------------------------------
def _linear_kernel(x_ref, w_ref, b_ref, o_ref, acc_ref):
    """Blocks: x (tm, tk), w (tn, tk), b (1, tn), o (tm, tn).

    Grid axis 2 (k) is the reduction; acc_ref is an f32 VMEM accumulator.
    MXU operands are cast to bf16; accumulation stays in f32.
    """
    @pl.when(pl.program_id(2) == 0)
    def _():
        acc_ref[...] = jnp.zeros(acc_ref.shape, acc_ref.dtype)

    # Contract the last dims of both operands: no weight transpose needed, MXU
    # consumes W in PyTorch's [out, in] layout directly.
    acc_ref[...] += lax.dot_general(
        x_ref[...].astype(jnp.bfloat16),
        w_ref[...].astype(jnp.bfloat16),
        dimension_numbers=(((1,), (1,)), ((), ())),
        preferred_element_type=jnp.float32)

    @pl.when(pl.program_id(2) == pl.num_programs(2) - 1)
    def _():
        o_ref[...] = (acc_ref[...] + b_ref[...].astype(jnp.float32)).astype(o_ref.dtype)


def pallas_linear(x, w, b, *, tm=512, tn=512, tk=512):
    """y = x @ w^T + b with x: (M, K), w: (N, K), b: (N,) -> (M, N)."""
    M, K = x.shape
    N, _ = w.shape
    tm = _pick_tile(M, tm, 8)      # sublane dim: multiples of 8 are legal
    tn = _pick_tile(N, tn, 128)    # lane dims: keep at multiples of 128 (never 8)
    tk = _pick_tile(K, tk, 128)

    itemsize = jnp.dtype(x.dtype).itemsize
    block_bytes = (tm * tk + tn * tk + tn + tm * tn) * itemsize
    scratch_bytes = tm * tn * 4

    return pl.pallas_call(
        _linear_kernel,
        out_shape=jax.ShapeDtypeStruct((M, N), x.dtype),
        grid_spec=pltpu.PrefetchScalarGridSpec(
            num_scalar_prefetch=0,
            grid=(M // tm, N // tn, K // tk),
            in_specs=[
                pl.BlockSpec((tm, tk), lambda i, j, k: (i, k)),
                pl.BlockSpec((tn, tk), lambda i, j, k: (j, k)),
                pl.BlockSpec((1, tn), lambda i, j, k: (0, j)),
            ],
            out_specs=pl.BlockSpec((tm, tn), lambda i, j, k: (i, j)),
            scratch_shapes=[pltpu.VMEM((tm, tn), jnp.float32)],
        ),
        compiler_params=pltpu.CompilerParams(
            dimension_semantics=("parallel", "parallel", "arbitrary"),
            vmem_limit_bytes=_vmem_limit_bytes(block_bytes, scratch_bytes)),
    )(x, w, b.reshape(1, N))


# ----------------------------------------------------------------------------
# Flash-style attention kernel (online softmax, K/V streamed in tk blocks)
# ----------------------------------------------------------------------------
def _flash_attn_kernel(q_ref, k_ref, v_ref, o_ref, m_sc, l_sc, acc_sc,
                       *, heads_per_group, d_k):
    """One (batch, head_group, q_tile, kv_tile) step.

    Blocks: q (1, tq, hd), k/v (1, tk, hd), o (1, tq, hd) with hd = hpg * d_k.
    The kv axis (grid axis 3) is the online-softmax reduction; m/l/acc are f32
    VMEM scratch persisting across kv steps.  The softmax scale is already
    folded into the Q projection weights.
    """
    ki = pl.program_id(3)

    @pl.when(ki == 0)
    def _():
        m_sc[...] = jnp.full(m_sc.shape, -jnp.inf, m_sc.dtype)
        l_sc[...] = jnp.zeros(l_sc.shape, l_sc.dtype)
        acc_sc[...] = jnp.zeros(acc_sc.shape, acc_sc.dtype)

    q = q_ref[0].astype(jnp.bfloat16)   # (tq, hd)
    k = k_ref[0].astype(jnp.bfloat16)   # (tk, hd)
    v = v_ref[0].astype(jnp.bfloat16)   # (tk, hd)

    # Static per-head loop within the group (single iteration when d_k >= 128,
    # i.e. the block already holds exactly one lane-dense head).
    for h in range(heads_per_group):
        lo = h * d_k
        qh = q[:, lo:lo + d_k]
        kh = k[:, lo:lo + d_k]
        vh = v[:, lo:lo + d_k]

        # scores = qh @ kh^T (contract last dims; no k transpose), f32 result.
        s = lax.dot_general(qh, kh,
                            dimension_numbers=(((1,), (1,)), ((), ())),
                            preferred_element_type=jnp.float32)       # (tq, tk)

        m_prev = m_sc[h]                                              # (tq, 1)
        m_new = jnp.maximum(m_prev, jnp.max(s, axis=-1, keepdims=True))
        alpha = jnp.exp(m_prev - m_new)
        p = jnp.exp(s - m_new)

        l_sc[h] = alpha * l_sc[h] + jnp.sum(p, axis=-1, keepdims=True)
        acc_sc[h] = alpha * acc_sc[h] + jnp.dot(
            p.astype(jnp.bfloat16), vh, preferred_element_type=jnp.float32)
        m_sc[h] = m_new

    @pl.when(ki == pl.num_programs(3) - 1)
    def _():
        if heads_per_group == 1:
            inv_l = pl.reciprocal(l_sc[0], approx=True)
            o_ref[0] = (acc_sc[0] * inv_l).astype(o_ref.dtype)
        else:
            for h in range(heads_per_group):
                lo = h * d_k
                inv_l = pl.reciprocal(l_sc[h], approx=True)
                o_ref[0, :, lo:lo + d_k] = (acc_sc[h] * inv_l).astype(o_ref.dtype)


def pallas_flash_attention(qp, kp, vp, heads, *, tq_target=256, tk_target=512):
    """qp/kp/vp: (B, S, d_model) projected activations -> (B, S, d_model).

    Output is produced directly in the concat-heads layout (head h in columns
    [h*d_k, (h+1)*d_k)), so no transposes are needed around the call.
    """
    B, S, d_model = qp.shape
    d_k = d_model // heads
    hpg = _heads_per_group(heads, d_k)
    groups = heads // hpg
    hd = hpg * d_k

    tq = _pick_seq_tile(S, tq_target)
    tk = _pick_seq_tile(S, tk_target)

    itemsize = jnp.dtype(qp.dtype).itemsize
    block_bytes = (tq * hd + 2 * tk * hd + tq * hd) * itemsize
    scratch_bytes = hpg * (2 * tq + tq * d_k) * 4

    kernel = functools.partial(_flash_attn_kernel, heads_per_group=hpg, d_k=d_k)

    return pl.pallas_call(
        kernel,
        out_shape=jax.ShapeDtypeStruct((B, S, d_model), qp.dtype),
        grid_spec=pltpu.PrefetchScalarGridSpec(
            num_scalar_prefetch=0,
            grid=(B, groups, S // tq, S // tk),
            in_specs=[
                pl.BlockSpec((1, tq, hd), lambda b, g, qi, ki: (b, qi, g)),
                pl.BlockSpec((1, tk, hd), lambda b, g, qi, ki: (b, ki, g)),
                pl.BlockSpec((1, tk, hd), lambda b, g, qi, ki: (b, ki, g)),
            ],
            out_specs=pl.BlockSpec((1, tq, hd), lambda b, g, qi, ki: (b, qi, g)),
            scratch_shapes=[
                pltpu.VMEM((hpg, tq, 1), jnp.float32),     # running max m
                pltpu.VMEM((hpg, tq, 1), jnp.float32),     # running denom l
                pltpu.VMEM((hpg, tq, d_k), jnp.float32),   # running output acc
            ],
        ),
        compiler_params=pltpu.CompilerParams(
            dimension_semantics=("parallel", "parallel", "parallel", "arbitrary"),
            vmem_limit_bytes=_vmem_limit_bytes(block_bytes, scratch_bytes)),
    )(qp, kp, vp)


# ----------------------------------------------------------------------------
# Module forward pass
# ----------------------------------------------------------------------------
def multi_head_attention(params, q, k, v, heads, *, attn_tq=256, attn_tk=512):
    """Forward pass mirroring the PyTorch module (eval mode, mask=None)."""
    B, S, d_model = q.shape
    d_k = d_model // heads
    scale = 1.0 / (float(d_k) ** 0.5)

    x_q = q.reshape(B * S, d_model)

    if (q is k) and (k is v):
        # Self-attention: one fused projection with Wq|Wk|Wv concatenated along
        # the output dim (the 1/sqrt(d_k) scale is folded into Wq/bq here).
        w_qkv = jnp.concatenate(
            [params["wq"] * scale, params["wk"], params["wv"]], axis=0)
        b_qkv = jnp.concatenate(
            [params["bq"] * scale, params["bk"], params["bv"]], axis=0)
        qkv = pallas_linear(x_q, w_qkv, b_qkv)                    # (B*S, 3*D)
        qp = qkv[:, :d_model].reshape(B, S, d_model)
        kp = qkv[:, d_model:2 * d_model].reshape(B, S, d_model)
        vp = qkv[:, 2 * d_model:].reshape(B, S, d_model)
    else:
        # Cross-attention: three separate projections (no activation stacking).
        qp = pallas_linear(x_q, params["wq"] * scale,
                           params["bq"] * scale).reshape(B, S, d_model)
        kp = pallas_linear(k.reshape(B * S, d_model), params["wk"],
                           params["bk"]).reshape(B, S, d_model)
        vp = pallas_linear(v.reshape(B * S, d_model), params["wv"],
                           params["bv"]).reshape(B, S, d_model)

    # Flash-style attention; output already in concat-heads layout.
    ctx = pallas_flash_attention(qp, kp, vp, heads,
                                 tq_target=attn_tq, tk_target=attn_tk)

    # Output projection.
    out = pallas_linear(ctx.reshape(B * S, d_model), params["wo"], params["bo"])
    return out.reshape(B, S, d_model)


# ----------------------------------------------------------------------------
# Pure-JAX reference (for correctness check)
# ----------------------------------------------------------------------------
def reference_mha(params, q, k, v, heads):
    B, S, d_model = q.shape
    d_k = d_model // heads

    def lin(x, w, b):
        return x @ w.T + b

    qh = lin(q, params["wq"], params["bq"]).reshape(B, S, heads, d_k).transpose(0, 2, 1, 3)
    kh = lin(k, params["wk"], params["bk"]).reshape(B, S, heads, d_k).transpose(0, 2, 1, 3)
    vh = lin(v, params["wv"], params["bv"]).reshape(B, S, heads, d_k).transpose(0, 2, 1, 3)
    scores = jnp.einsum("bhqd,bhkd->bhqk", qh, kh) / (d_k ** 0.5)
    p = jax.nn.softmax(scores, axis=-1)
    ctx = jnp.einsum("bhqk,bhkd->bhqd", p, vh)
    concat = ctx.transpose(0, 2, 1, 3).reshape(B, S, d_model)
    return lin(concat, params["wo"], params["bo"])


# ----------------------------------------------------------------------------
# Main
# ----------------------------------------------------------------------------
if __name__ == "__main__":
    def make_params(key, d_model, wscale=0.05):
        ks = jax.random.split(key, 8)
        return {
            "wq": jax.random.normal(ks[0], (d_model, d_model), jnp.float32) * wscale,
            "bq": jax.random.normal(ks[1], (d_model,), jnp.float32) * wscale,
            "wk": jax.random.normal(ks[2], (d_model, d_model), jnp.float32) * wscale,
            "bk": jax.random.normal(ks[3], (d_model,), jnp.float32) * wscale,
            "wv": jax.random.normal(ks[4], (d_model, d_model), jnp.float32) * wscale,
            "bv": jax.random.normal(ks[5], (d_model,), jnp.float32) * wscale,
            "wo": jax.random.normal(ks[6], (d_model, d_model), jnp.float32) * wscale,
            "bo": jax.random.normal(ks[7], (d_model,), jnp.float32) * wscale,
        }

    key = jax.random.PRNGKey(0)
    k0, k1, k2, k3, k4 = jax.random.split(key, 5)

    # --- Test 1: cross-attention (distinct q/k/v), tiny shapes ----------------
    B, S, d_model, heads = 2, 8, 32, 4
    params = make_params(k0, d_model)
    q = jax.random.normal(k1, (B, S, d_model), jnp.float32)
    k = jax.random.normal(k2, (B, S, d_model), jnp.float32)
    v = jax.random.normal(k3, (B, S, d_model), jnp.float32)

    out = jax.block_until_ready(multi_head_attention(params, q, k, v, heads))
    ref = reference_mha(params, q, k, v, heads)
    assert out.shape == (B, S, d_model)
    # Tolerance reflects bf16 MXU operands + approx softmax reciprocal.
    assert jnp.allclose(out, ref, atol=2e-2, rtol=2e-2), \
        "mismatch vs reference (cross-attention)"

    # --- Test 2: self-attention (q is k is v): fused QKV projection and
    #     multi-block flash tiling (2 q-tiles x 2 kv-tiles) --------------------
    B2, S2, d_model2, heads2 = 1, 256, 128, 2
    params2 = make_params(k4, d_model2)
    x = jax.random.normal(jax.random.PRNGKey(1), (B2, S2, d_model2), jnp.float32)

    out2 = jax.block_until_ready(
        multi_head_attention(params2, x, x, x, heads2, attn_tq=128, attn_tk=128))
    ref2 = reference_mha(params2, x, x, x, heads2)
    assert out2.shape == (B2, S2, d_model2)
    assert jnp.allclose(out2, ref2, atol=2e-2, rtol=2e-2), \
        "mismatch vs reference (self-attention)"

    print("KERNEL_OK")
</pallas_src>

<mosaic_0001>
module attributes {stable_mosaic.version = 11 : i64} {
  func.func @_linear_kernel(%arg0: i32, %arg1: i32, %arg2: i32, %arg3: memref<16x32xf32, #tpu.memory_space<vmem>>, %arg4: memref<32x32xf32, #tpu.memory_space<vmem>>, %arg5: memref<1x32xf32, #tpu.memory_space<vmem>>, %arg6: memref<16x32xf32, #tpu.memory_space<vmem>>, %arg7: memref<16x32xf32, #tpu.memory_space<vmem>>) attributes {dimension_semantics = [#tpu.dimension_semantics<parallel>, #tpu.dimension_semantics<parallel>, #tpu.dimension_semantics<arbitrary>], iteration_bounds = array<i64: 1, 1, 1>, scalar_prefetch = 0 : i64, scratch_operands = 1 : i64, tpu.core_type = #tpu.core_type<tc>, window_params = [{transform_indices = @transform_0, window_bounds = array<i64: 16, 32>}, {transform_indices = @transform_1, window_bounds = array<i64: 32, 32>}, {transform_indices = @transform_2, window_bounds = array<i64: 1, 32>}, {transform_indices = @transform_3, window_bounds = array<i64: 16, 32>}]} {
    %c0_i32 = arith.constant 0 : i32
    %0 = arith.cmpi eq, %arg2, %c0_i32 : i32
    %1 = arith.extui %0 : i1 to i32
    %c0_i32_0 = arith.constant 0 : i32
    %2 = arith.cmpi ne, %1, %c0_i32_0 : i32
    scf.if %2 {
      %cst_10 = arith.constant 0.000000e+00 : f32
      %14 = vector.broadcast %cst_10 : f32 to vector<16x32xf32>
      %c0_11 = arith.constant 0 : index
      %c0_12 = arith.constant 0 : index
      %15 = vector.load %arg7[%c0_11, %c0_12] : memref<16x32xf32, #tpu.memory_space<vmem>>, vector<16x32xf32>
      tpu.vector_store %arg7[%c0_11, %c0_12], %14 {strides = array<i32>} : memref<16x32xf32, #tpu.memory_space<vmem>>, vector<16x32xf32>,
    } else {
    }
    %c0 = arith.constant 0 : index
    %c0_1 = arith.constant 0 : index
    %3 = vector.load %arg7[%c0, %c0_1] : memref<16x32xf32, #tpu.memory_space<vmem>>, vector<16x32xf32>
    %c0_2 = arith.constant 0 : index
    %c0_3 = arith.constant 0 : index
    %4 = vector.load %arg3[%c0_2, %c0_3] : memref<16x32xf32, #tpu.memory_space<vmem>>, vector<16x32xf32>
    %5 = arith.truncf %4 : vector<16x32xf32> to vector<16x32xbf16>
    %c0_4 = arith.constant 0 : index
    %c0_5 = arith.constant 0 : index
    %6 = vector.load %arg4[%c0_4, %c0_5] : memref<32x32xf32, #tpu.memory_space<vmem>>, vector<32x32xf32>
    %7 = arith.truncf %6 : vector<32x32xf32> to vector<32x32xbf16>
    %cst = arith.constant dense<0.000000e+00> : vector<16x32xf32>
    %8 = tpu.matmul %5, %7, %cst {dimension_numbers = #tpu.dot_dimension_numbers<[1], [1], [0], [0], [0, 0, 1, 0], [], []>} : vector<16x32xbf16>, vector<32x32xbf16>, vector<16x32xf32> -> vector<16x32xf32>
    %9 = arith.addf %3, %8 : vector<16x32xf32>
    %c0_6 = arith.constant 0 : index
    %c0_7 = arith.constant 0 : index
    %10 = vector.load %arg7[%c0_6, %c0_7] : memref<16x32xf32, #tpu.memory_space<vmem>>, vector<16x32xf32>
    tpu.vector_store %arg7[%c0_6, %c0_7], %9 {strides = array<i32>} : memref<16x32xf32, #tpu.memory_space<vmem>>, vector<16x32xf32>,
    %c0_i32_8 = arith.constant 0 : i32
    %11 = arith.cmpi eq, %arg2, %c0_i32_8 : i32
    %12 = arith.extui %11 : i1 to i32
    %c0_i32_9 = arith.constant 0 : i32
    %13 = arith.cmpi ne, %12, %c0_i32_9 : i32
    scf.if %13 {
      %c0_10 = arith.constant 0 : index
      %c0_11 = arith.constant 0 : index
      %14 = vector.load %arg7[%c0_10, %c0_11] : memref<16x32xf32, #tpu.memory_space<vmem>>, vector<16x32xf32>
      %c0_12 = arith.constant 0 : index
      %c0_13 = arith.constant 0 : index
      %15 = vector.load %arg5[%c0_12, %c0_13] : memref<1x32xf32, #tpu.memory_space<vmem>>, vector<1x32xf32>
      %16 = vector.broadcast %15 : vector<1x32xf32> to vector<16x32xf32>
      %17 = arith.addf %14, %16 : vector<16x32xf32>
      %c0_14 = arith.constant 0 : index
      %c0_15 = arith.constant 0 : index
      %18 = vector.load %arg6[%c0_14, %c0_15] : memref<16x32xf32, #tpu.memory_space<vmem>>, vector<16x32xf32>
      tpu.vector_store %arg6[%c0_14, %c0_15], %17 {strides = array<i32>} : memref<16x32xf32, #tpu.memory_space<vmem>>, vector<16x32xf32>,
    } else {
    }
    return
  }
  func.func @transform_0(%arg0: i32, %arg1: i32, %arg2: i32) -> (i32, i32) {
    %c0_i32 = arith.constant 0 : i32
    return %arg0, %arg2 : i32, i32
  }
  func.func @transform_1(%arg0: i32, %arg1: i32, %arg2: i32) -> (i32, i32) {
    %c0_i32 = arith.constant 0 : i32
    return %arg1, %arg2 : i32, i32
  }
  func.func @transform_2(%arg0: i32, %arg1: i32, %arg2: i32) -> (i32, i32) {
    %c0_i32 = arith.constant 0 : i32
    %c0_i32_0 = arith.constant 0 : i32
    return %c0_i32, %arg1 : i32, i32
  }
  func.func @transform_3(%arg0: i32, %arg1: i32, %arg2: i32) -> (i32, i32) {
    %c0_i32 = arith.constant 0 : i32
    return %arg0, %arg1 : i32, i32
  }
}

</mosaic_0001>

<llo_original>
// kernel: tpu_custom_call.1
$region0: #{tpu_custom_call.1}
  #allocation0 [shape = 'u32[]', space=smem, size = 0x4, offset = 0x4, fixed_abs, tag = 'smem constant byte address 0x4 - core index']
  #allocation1 [shape = 'u32[144,128]{1,0:T(1,128)}', space=vmem, size = 0x12000, scoped, tag = 'internal scratch']
  #allocation2 [shape = 'f32[16,32]{1,0:T(8,128)}', space=vmem, size = 0x2000, scoped, tag = 'scratch operand']
  %s0 = inlined_call_operand.hbm [shape: f32[16,32], index: 0, kind: input, shape index: {}]
  %s1 = inlined_call_operand.hbm [shape: f32[32,32], index: 1, kind: input, shape index: {}]
  %s2 = inlined_call_operand.vmem [shape: f32[1,32], index: 2, kind: input, shape index: {}]
  %s3 = inlined_call_operand.hbm [shape: f32[16,32], index: 3, kind: output, shape index: {}]
  %s4 = sld [smem:[#allocation0]]
  $region38: #{tpu_custom_call.1} parent=0
    _
  %s6 = ssub.s32 1, %s4
  %s7 = scalar_select 0, %s6, %s4
  $region1: #{tpu_custom_call.1} parent=0
    #allocation3 [shape = 'u8[8192]{0}', space=vmem, size = 0x2000, scoped, tag = 'input window, operand 0, single buffered']
    #allocation4 [shape = 's32[1]{0}', space=sflag, size = 0x4, scoped, tag = 'scoped memory for tpu_custom_call.1']
    #allocation5 [shape = 's32[1]{0}', space=sflag, size = 0x4, scoped, tag = 'scoped memory for tpu_custom_call.1']
    #allocation6 [shape = 'u8[16384]{0}', space=vmem, size = 0x4000, scoped, tag = 'input window, operand 1, single buffered']
    #allocation7 [shape = 's32[1]{0}', space=sflag, size = 0x4, scoped, tag = 'scoped memory for tpu_custom_call.1']
    #allocation8 [shape = 'u8[8192]{0}', space=vmem, size = 0x2000, scoped, tag = 'output window, operand 0, single buffered']
    %8 = vsyncpa [#allocation4], 0
    %9 = vsyncpa [#allocation7], 0
    %10 = vsyncpa [#allocation5], 0
    // Predicated region
    $region2: #{tpu_custom_call.1} parent=1 // pred_check
      _
    $region3: #{tpu_custom_call.1} parent=1 // pred_check_branch
      %12 = sbr.rel (0) target = $region5
    $region4: #{tpu_custom_call.1} parent=1 // pred_region
      %s14 = ssub.s32 256, 256
      %15 = vsyncadd [#allocation4], %s14
      %s16 = sshll.u32 [#allocation3], 4
      %s17 = int_to_ptr.vmem [resolvable:$true] %s16
      %22 = dma.hbm_to_vmem [thread:$0]  %s0, 256, %s17, [#allocation4], 128, 128, 8
    $region5: #{tpu_custom_call.1} parent=1 // pred_fallthru
      _
    // Predicated region
    $region6: #{tpu_custom_call.1} parent=1 // pred_check
      _
    $region7: #{tpu_custom_call.1} parent=1 // pred_check_branch
      %24 = sbr.rel (0) target = $region9
    $region8: #{tpu_custom_call.1} parent=1 // pred_region
      %s26 = ssub.s32 512, 512
      %27 = vsyncadd [#allocation7], %s26
      %s28 = sshll.u32 [#allocation6], 4
      %s29 = int_to_ptr.vmem [resolvable:$true] %s28
      %34 = dma.hbm_to_vmem [thread:$0]  %s1, 512, %s29, [#allocation7], 128, 128, 8
    $region9: #{tpu_custom_call.1} parent=1 // pred_fallthru
      _
    // Predicated region
    $region10: #{tpu_custom_call.1} parent=1 // pred_check
      _
    $region11: #{tpu_custom_call.1} parent=1 // pred_check_branch
      %36 = sbr.rel (0) target = $region13
    $region12: #{tpu_custom_call.1} parent=1 // pred_region
      _
    $region13: #{tpu_custom_call.1} parent=1 // pred_fallthru
      _
    // Predicated region
    $region14: #{tpu_custom_call.1} parent=1 // pred_check
      _
    $region15: #{tpu_custom_call.1} parent=1 // pred_check_branch
      %38 = sbr.rel (0) target = $region17
    $region16: #{tpu_custom_call.1} parent=1 // pred_region
      %39 = dma.done [#allocation4], 256
    $region17: #{tpu_custom_call.1} parent=1 // pred_fallthru
      _
    // Predicated region
    $region18: #{tpu_custom_call.1} parent=1 // pred_check
      _
    $region19: #{tpu_custom_call.1} parent=1 // pred_check_branch
      %41 = sbr.rel (0) target = $region21
    $region20: #{tpu_custom_call.1} parent=1 // pred_region
      %42 = dma.done [#allocation7], 512
    $region21: #{tpu_custom_call.1} parent=1 // pred_fallthru
      _
    %p44 = scmp.eq.s32.totalorder 0, 0
    // Predicated region
    $region22: #{tpu_custom_call.1} parent=1 // pred_check
      %p45 = pneg %p44
    $region23: #{tpu_custom_call.1} parent=1 // pred_check_branch
      %47 = sbr.rel (%p45) target = $region25
    $region24: #{tpu_custom_call.1} parent=1 // pred_region
      %vm48 = vcmask 261120
      %49 = vst.msk [vmem:[#allocation2] sm:$0xff] %vm48, 0.0
      %50 = vst.msk [vmem:[#allocation2 + $0x8] sm:$0xff] %vm48, 0.0
    $region25: #{tpu_custom_call.1} parent=1 // pred_fallthru
      _
    %v51 = vld [vmem:[#allocation2] sm:$0xff]
    %v52 = vld [vmem:[#allocation2 + $0x8] sm:$0xff]
    %v53 = vld [vmem:[#allocation3] sm:$0xff]
    %v54 = vld [vmem:[#allocation3 + $0x8] sm:$0xff]
    %v55 = vpack.c.bf16 %v54, %v53
    %v56 = vld [vmem:[#allocation6] sm:$0xff]
    %v57 = vld [vmem:[#allocation6 + $0x8] sm:$0xff]
    %v58 = vld [vmem:[#allocation6 + $0x10] sm:$0xff]
    %v59 = vld [vmem:[#allocation6 + $0x18] sm:$0xff]
    %v60 = vpack.c.bf16 %v57, %v56
    %v61 = vpack.c.bf16 %v59, %v58
    %vm62 = vcmask 261120
    %v64 = vsel %vm62, %v55, 0
    %v67 = vsel %vm62, %v60, 0
    %v70 = vsel %vm62, %v61, 0
    %72 = vmatprep.subr.bf16.mxu0 0
    %73 = vmatpush1.bf16.xpose.msra.mxu0 0
    %74 = vmatprep.subr.bf16.mxu0 0
    %75 = vmatpush1.bf16.xpose.msra.mxu0 0
    %76 = vmatprep.subr.bf16.mxu0 0
    %77 = vmatpush1.bf16.xpose.msra.mxu0 0
    %78 = vmatprep.subr.bf16.mxu0 0
    %79 = vmatpush1.bf16.xpose.msra.mxu0 0
    %80 = vmatprep.subr.bf16.mxu0 0
    %81 = vmatpush1.bf16.xpose.msra.mxu0 0
    %82 = vmatprep.subr.bf16.mxu0 0
    %83 = vmatpush1.bf16.xpose.msra.mxu0 0
    %84 = vmatprep.subr.bf16.mxu0 0
    %85 = vmatpush1.bf16.xpose.msra.mxu0 %v70
    %86 = vmatprep.subr.bf16.mxu0 0
    %87 = vmatpush1.bf16.xpose.msra.mxu0 %v67
    %88 = vmatprep.subr.bf16.mxu0 0
    %89 = vmatpush2.bf16.xpose.msra.mxu0 0
    %90 = vmatprep.subr.bf16.mxu0 0
    %91 = vmatpush2.bf16.xpose.msra.mxu0 0
    %92 = vmatprep.subr.bf16.mxu0 0
    %93 = vmatpush2.bf16.xpose.msra.mxu0 0
    %94 = vmatprep.subr.bf16.mxu0 0
    %95 = vmatpush2.bf16.xpose.msra.mxu0 0
    %96 = vmatprep.subr.bf16.mxu0 0
    %97 = vmatpush2.bf16.xpose.msra.mxu0 0
    %98 = vmatprep.subr.bf16.mxu0 0
    %99 = vmatpush2.bf16.xpose.msra.mxu0 0
    %100 = vmatprep.subr.bf16.mxu0 0
    %101 = vmatpush2.bf16.xpose.msra.mxu0 0
    %102 = vmatprep.subr.bf16.mxu0 0
    %103 = vmatpush2.bf16.xpose.msra.mxu0 0
    %104 = vmatprep.mubr.bf16.mxu0 0
    %105 = vmatmul.mubr.bf16.gmra.mxu0 %v64
    %v106 = vpop.f32.mrf.mxu0
    %v107 = vadd.f32 0.0, %v106
    %v108 = vpop.f32.mrf.mxu0
    %v109 = vpop.f32.mrf.mxu0
    %v110 = vadd.f32 0.0, %v109
    %v111 = vpop.f32.mrf.mxu0
    %112 = vdwg.mxu0
    %v113 = vadd.f32 %v51, %v107
    %v114 = vadd.f32 %v52, %v110
    %115 = vst.msk [vmem:[#allocation2] sm:$0xff] %vm62, %v113
    %116 = vst.msk [vmem:[#allocation2 + $0x8] sm:$0xff] %vm62, %v114
    // Predicated region
    $region26: #{tpu_custom_call.1} parent=1 // pred_check
      %p117 = pneg %p44
    $region27: #{tpu_custom_call.1} parent=1 // pred_check_branch
      %119 = sbr.rel (%p117) target = $region29
    $region28: #{tpu_custom_call.1} parent=1 // pred_region
      %v120 = vld [vmem:[#allocation2] sm:$0xff]
      %v121 = vld [vmem:[#allocation2 + $0x8] sm:$0xff]
      %v122 = vld [vmem:[%s2] sm:$0x1]
      %v124 = vlaneseq
      %v125 = vshrl.u32 %v124, 7
      %v126 = vsub.s32 0, %v125
      %v127 = vrot.slane %v122, %v126
      %v129 = vadd.f32 %v120, %v127
      %v130 = vadd.f32 %v121, %v127
      %131 = vst.msk [vmem:[#allocation8] sm:$0xff] %vm62, %v129
      %132 = vst.msk [vmem:[#allocation8 + $0x8] sm:$0xff] %vm62, %v130
    $region29: #{tpu_custom_call.1} parent=1 // pred_fallthru
      _
    // Predicated region
    $region30: #{tpu_custom_call.1} parent=1 // pred_check
      _
    $region31: #{tpu_custom_call.1} parent=1 // pred_check_branch
      %134 = sbr.rel (0) target = $region33
    $region32: #{tpu_custom_call.1} parent=1 // pred_region
      %s136 = ssub.s32 256, 256
      %137 = vsyncadd [#allocation5], %s136
      %s138 = sshll.u32 [#allocation8], 4
      %s139 = int_to_ptr.vmem [resolvable:$true] %s138
      %144 = dma.vmem_to_hbm [thread:$0]  %s139, 256, %s3, [#allocation5], 128, 128, 8
    $region33: #{tpu_custom_call.1} parent=1 // pred_fallthru
      _
    // Predicated region
    $region34: #{tpu_custom_call.1} parent=1 // pred_check
      _
    $region35: #{tpu_custom_call.1} parent=1 // pred_check_branch
      %146 = sbr.rel (0) target = $region37
    $region36: #{tpu_custom_call.1} parent=1 // pred_region
      %147 = dma.done [#allocation5], 256
    $region37: #{tpu_custom_call.1} parent=1 // pred_fallthru
      _
    %148 = vsyncpa [#allocation4], 1
    %149 = vsyncpa [#allocation7], 1
    %150 = vsyncpa [#allocation5], 1

</llo_original>
